<compile_context>
chip_gen: v7x
topology: tpu7x:2x2x1
jax: 0.10.0
libtpu: 0.0.40
codegen_flags: <defaults>
</compile_context>

<pallas_src>
import jax
import jax.numpy as jnp
from jax.experimental import pallas as pl
from jax.experimental.pallas import tpu as pltpu


# ----------------------------- Pallas kernel -------------------------------
def _token_regression_kernel(x_ref, keep_ref, w_ref, b_ref, out_ref):
    # x_ref    : (TR, H)  hidden-state rows (bf16 or f32)
    # keep_ref : (TR, 1)  f32 combined keep mask = attn * (id!=cls) * (id!=sep)
    # w_ref    : (H, 1)   regression weight, same dtype as x (VMEM-resident)
    # b_ref    : (1, 1)   f32 bias scalar in SMEM
    # out_ref  : (TR, 1)  f32 masked logits
    logits = jnp.dot(x_ref[...], w_ref[...],
                     preferred_element_type=jnp.float32)          # MXU, f32 acc
    out_ref[...] = (logits + b_ref[0, 0]) * keep_ref[...]


# ------------------------------ wrapper -------------------------------------
def token_regression_head(seq_out, input_ids, attention_mask, w, b,
                          *, cls_id, sep_id, block_rows=512):
    """logits = (seq_out @ w + b) * mask * (ids != cls) * (ids != sep)."""
    B, S, H = seq_out.shape
    BS = B * S

    # Keep the backbone's dtype (bf16) for the dominant read; MXU accumulates f32.
    x = seq_out.reshape(BS, H)

    # One precomputed keep mask instead of two int32 inputs.
    keep = (attention_mask.astype(jnp.float32)
            * (input_ids != cls_id).astype(jnp.float32)
            * (input_ids != sep_id).astype(jnp.float32)).reshape(BS, 1)

    w2 = w.reshape(H, 1).astype(x.dtype)                 # bf16 x bf16 -> f32 acc
    b2 = jnp.asarray(b, jnp.float32).reshape(1, 1)

    # Row tile: multiple of 8 sublanes, capped by the total row count.
    tr = max(8, (min(block_rows, BS) // 8) * 8)
    bs_pad = pl.cdiv(BS, tr) * tr
    if bs_pad != BS:
        x = jnp.pad(x, ((0, bs_pad - BS), (0, 0)))
        keep = jnp.pad(keep, ((0, bs_pad - BS), (0, 0)))

    out = pl.pallas_call(
        _token_regression_kernel,
        out_shape=jax.ShapeDtypeStruct((bs_pad, 1), jnp.float32),
        grid=(bs_pad // tr,),
        in_specs=[
            pl.BlockSpec((tr, H), lambda i: (i, 0)),             # hidden rows
            pl.BlockSpec((tr, 1), lambda i: (i, 0)),             # keep mask
            pl.BlockSpec((H, 1), lambda i: (0, 0)),              # weight (shared)
            pl.BlockSpec(memory_space=pltpu.MemorySpace.SMEM),   # bias scalar
        ],
        out_specs=pl.BlockSpec((tr, 1), lambda i: (i, 0)),
        compiler_params=pltpu.CompilerParams(
            dimension_semantics=("parallel",)),
    )(x, keep, w2, b2)

    return out[:BS].reshape(B, S, 1)


# -------------------- deterministic synthetic "backbone" --------------------
# TODO(synk): the real backbone is an arbitrary HF transformer; here it is a
# deterministic embedding lookup producing a bf16 last_hidden_state in plain JAX.
def synthetic_backbone(input_ids, attention_mask, emb_table):
    seq_out = jnp.take(emb_table, input_ids, axis=0)             # (B, S, H)
    seq_out = seq_out * attention_mask[..., None].astype(seq_out.dtype)
    return seq_out.astype(jnp.bfloat16)


def model_forward(input_ids, attention_mask, params, *, cls_id, sep_id):
    seq_out = synthetic_backbone(input_ids, attention_mask, params["emb"])
    return token_regression_head(seq_out, input_ids, attention_mask,
                                 params["w"], params["b"],
                                 cls_id=cls_id, sep_id=sep_id)


# ------------------------------- reference ----------------------------------
def reference_forward(input_ids, attention_mask, params, *, cls_id, sep_id):
    seq_out = synthetic_backbone(input_ids, attention_mask,
                                 params["emb"]).astype(jnp.float32)
    logits = seq_out @ params["w"].reshape(-1, 1) + params["b"].reshape(1, 1)
    logits = logits * attention_mask[..., None].astype(jnp.float32)
    logits = logits * (input_ids != cls_id)[..., None].astype(jnp.float32)
    logits = logits * (input_ids != sep_id)[..., None].astype(jnp.float32)
    return logits


if __name__ == "__main__":
    B, S, H = 2, 8, 32
    VOCAB = 100
    CLS_ID, SEP_ID, PAD_ID = 1, 2, 0

    key = jax.random.PRNGKey(0)
    k_emb, k_w, k_b, k_ids = jax.random.split(key, 4)

    params = {
        "emb": jax.random.normal(k_emb, (VOCAB, H), jnp.float32) * 0.1,
        "w": jax.random.normal(k_w, (H, 1), jnp.float32) * 0.1,   # Linear(H, 1) weight
        "b": jax.random.normal(k_b, (1,), jnp.float32) * 0.1,     # Linear bias
    }

    # Build token sequences: [CLS] tok ... tok [SEP] PAD PAD
    body = jax.random.randint(k_ids, (B, S), 3, VOCAB)
    input_ids = body.at[:, 0].set(CLS_ID)
    input_ids = input_ids.at[:, 5].set(SEP_ID)
    input_ids = input_ids.at[:, 6:].set(PAD_ID)
    attention_mask = (input_ids != PAD_ID).astype(jnp.int32)

    out = model_forward(input_ids, attention_mask, params,
                        cls_id=CLS_ID, sep_id=SEP_ID)
    out = jax.block_until_ready(out)

    ref = reference_forward(input_ids, attention_mask, params,
                            cls_id=CLS_ID, sep_id=SEP_ID)

    assert out.shape == (B, S, 1), out.shape
    # bf16 activations/weights in the kernel vs f32 reference -> loose tolerance.
    assert jnp.allclose(out, ref, atol=2e-2, rtol=2e-2), (out, ref)
    print("KERNEL_OK")
</pallas_src>

<mosaic_0001>
module attributes {stable_mosaic.version = 11 : i64} {
  func.func @_token_regression_kernel(%arg0: i32, %arg1: memref<16x32xbf16, #tpu.memory_space<vmem>>, %arg2: memref<16x1xf32, #tpu.memory_space<vmem>>, %arg3: memref<32x1xbf16, #tpu.memory_space<vmem>>, %arg4: memref<1x1xf32, #tpu.memory_space<smem>>, %arg5: memref<16x1xf32, #tpu.memory_space<vmem>>) attributes {dimension_semantics = [#tpu.dimension_semantics<parallel>], iteration_bounds = array<i64: 1>, scalar_prefetch = 0 : i64, scratch_operands = 0 : i64, tpu.core_type = #tpu.core_type<tc>, window_params = [{transform_indices = @transform_0, window_bounds = array<i64: 16, 32>}, {transform_indices = @transform_1, window_bounds = array<i64: 16, 1>}, {pipeline_mode = #tpu.pipeline_mode<synchronous>, transform_indices = @transform_2, window_bounds = array<i64: 32, 1>}, {transform_indices = @transform_3, window_bounds = array<i64: 1, 1>}, {transform_indices = @transform_4, window_bounds = array<i64: 16, 1>}]} {
    %c0 = arith.constant 0 : index
    %c0_0 = arith.constant 0 : index
    %0 = vector.load %arg1[%c0, %c0_0] : memref<16x32xbf16, #tpu.memory_space<vmem>>, vector<16x32xbf16>
    %c0_1 = arith.constant 0 : index
    %c0_2 = arith.constant 0 : index
    %1 = vector.load %arg3[%c0_1, %c0_2] : memref<32x1xbf16, #tpu.memory_space<vmem>>, vector<32x1xbf16>
    %cst = arith.constant dense<0.000000e+00> : vector<16x1xf32>
    %2 = tpu.matmul %0, %1, %cst {dimension_numbers = #tpu.dot_dimension_numbers<[1], [0], [0], [1], [0, 0, 1, 1], [], []>} : vector<16x32xbf16>, vector<32x1xbf16>, vector<16x1xf32> -> vector<16x1xf32>
    %c0_3 = arith.constant 0 : index
    %c0_4 = arith.constant 0 : index
    %3 = memref.load %arg4[%c0_3, %c0_4] : memref<1x1xf32, #tpu.memory_space<smem>>
    %4 = vector.broadcast %3 : f32 to vector<16x1xf32>
    %5 = arith.addf %2, %4 : vector<16x1xf32>
    %c0_5 = arith.constant 0 : index
    %c0_6 = arith.constant 0 : index
    %6 = vector.load %arg2[%c0_5, %c0_6] : memref<16x1xf32, #tpu.memory_space<vmem>>, vector<16x1xf32>
    %7 = arith.mulf %5, %6 : vector<16x1xf32>
    %c0_7 = arith.constant 0 : index
    %c0_8 = arith.constant 0 : index
    %8 = vector.load %arg5[%c0_7, %c0_8] : memref<16x1xf32, #tpu.memory_space<vmem>>, vector<16x1xf32>
    tpu.vector_store %arg5[%c0_7, %c0_8], %7 {strides = array<i32>} : memref<16x1xf32, #tpu.memory_space<vmem>>, vector<16x1xf32>,
    return
  }
  func.func @transform_0(%arg0: i32) -> (i32, i32) {
    %c0_i32 = arith.constant 0 : i32
    %c0_i32_0 = arith.constant 0 : i32
    return %arg0, %c0_i32 : i32, i32
  }
  func.func @transform_1(%arg0: i32) -> (i32, i32) {
    %c0_i32 = arith.constant 0 : i32
    %c0_i32_0 = arith.constant 0 : i32
    return %arg0, %c0_i32 : i32, i32
  }
  func.func @transform_2(%arg0: i32) -> (i32, i32) {
    %c0_i32 = arith.constant 0 : i32
    %c0_i32_0 = arith.constant 0 : i32
    %c0_i32_1 = arith.constant 0 : i32
    return %c0_i32, %c0_i32_0 : i32, i32
  }
  func.func @transform_3(%arg0: i32) -> (i32, i32) {
    %c0_i32 = arith.constant 0 : i32
    %c0_i32_0 = arith.constant 0 : i32
    %c0_i32_1 = arith.constant 0 : i32
    return %c0_i32, %c0_i32_0 : i32, i32
  }
  func.func @transform_4(%arg0: i32) -> (i32, i32) {
    %c0_i32 = arith.constant 0 : i32
    %c0_i32_0 = arith.constant 0 : i32
    return %arg0, %c0_i32 : i32, i32
  }
}

</mosaic_0001>

<llo_original>
// kernel: tpu_custom_call.1
$region0: #{tpu_custom_call.1}
  #allocation0 [shape = 'u32[]', space=smem, size = 0x4, offset = 0x4, fixed_abs, tag = 'smem constant byte address 0x4 - core index']
  #allocation1 [shape = 'u32[144,128]{1,0:T(1,128)}', space=vmem, size = 0x12000, scoped, tag = 'internal scratch']
  #allocation2 [shape = 'f32[1,1]{1,0:T(1,128)S(6)}', space=smem, size = 0x200, scoped, tag = 'scoped memory for tpu_custom_call.1']
  %s0 = inlined_call_operand.vmem [shape: bf16[16,32], index: 0, kind: input, shape index: {}]
  %s1 = inlined_call_operand.vmem [shape: f32[16,1], index: 1, kind: input, shape index: {}]
  %s2 = inlined_call_operand.vmem [shape: bf16[32,1], index: 2, kind: input, shape index: {}]
  %s3 = inlined_call_operand.<no memory space> [shape: f32[1,1], index: 3, kind: input, shape index: {}]
  %s4 = inlined_call_operand.vmem [shape: f32[16,1], index: 4, kind: output, shape index: {}]
  %s5 = sld [smem:[#allocation0]]
  $region26: #{tpu_custom_call.1} parent=0
    _
  %s7 = ssub.s32 1, %s5
  %s8 = scalar_select 0, %s7, %s5
  %9 = sst [smem:[#allocation2]] %s3
  // Predicated region
  $region2: #{tpu_custom_call.1} parent=0 // pred_check
    _
  $region3: #{tpu_custom_call.1} parent=0 // pred_check_branch
    %11 = sbr.rel (0) target = $region5
  $region4: #{tpu_custom_call.1} parent=0 // pred_region
    _
  $region5: #{tpu_custom_call.1} parent=0 // pred_fallthru
    _
  // Predicated region
  $region6: #{tpu_custom_call.1} parent=0 // pred_check
    _
  $region7: #{tpu_custom_call.1} parent=0 // pred_check_branch
    %13 = sbr.rel (0) target = $region9
  $region8: #{tpu_custom_call.1} parent=0 // pred_region
    _
  $region9: #{tpu_custom_call.1} parent=0 // pred_fallthru
    _
  // Predicated region
  $region10: #{tpu_custom_call.1} parent=0 // pred_check
    _
  $region11: #{tpu_custom_call.1} parent=0 // pred_check_branch
    %15 = sbr.rel (0) target = $region13
  $region12: #{tpu_custom_call.1} parent=0 // pred_region
    _
  $region13: #{tpu_custom_call.1} parent=0 // pred_fallthru
    _
  // Predicated region
  $region14: #{tpu_custom_call.1} parent=0 // pred_check
    _
  $region15: #{tpu_custom_call.1} parent=0 // pred_check_branch
    %17 = sbr.rel (0) target = $region17
  $region16: #{tpu_custom_call.1} parent=0 // pred_region
    _
  $region17: #{tpu_custom_call.1} parent=0 // pred_fallthru
    _
  %v19 = vld [vmem:[%s0] sm:$0xf]
  %v20 = vld [vmem:[%s0 + $0x4] sm:$0xf]
  %v21 = vld [vmem:[%s2] sm:$0xf]
  %v22 = vld [vmem:[%s2 + $0x4] sm:$0xf]
  %v23 = vld [vmem:[%s2 + $0x8] sm:$0xf]
  %v24 = vld [vmem:[%s2 + $0xc] sm:$0xf]
  %s25 = sld [smem:[#allocation2]]
  %v26 = vstv %s25
  %v29 = vunpack.c.l.b16 %v19
  %v30 = vunpack.c.l.b16 %v20
  %v31 = vpack.c.b16 %v30, %v29
  %v36 = vunpack.c.l.b16 %v21
  %v37 = vunpack.c.l.b16 %v22
  %v38 = vunpack.c.l.b16 %v23
  %v39 = vunpack.c.l.b16 %v24
  %v40 = vpack.c.b16 %v37, %v36
  %v41 = vpack.c.b16 %v39, %v38
  %vm44 = vcmask 261120
  %v46 = vsel %vm44, %v31, 0
  %48 = vmatprep.subr.bf16.mxu0 0
  %49 = vmatpush1.bf16.msra.mxu0 %v40
  %50 = vmatprep.subr.bf16.mxu0 0
  %51 = vmatpush1.bf16.msra.mxu0 %v41
  %52 = vmatprep.subr.bf16.mxu0 0
  %53 = vmatpush1.bf16.msra.mxu0 0
  %54 = vmatprep.subr.bf16.mxu0 0
  %55 = vmatpush1.bf16.msra.mxu0 0
  %56 = vmatprep.subr.bf16.mxu0 0
  %57 = vmatpush1.bf16.msra.mxu0 0
  %58 = vmatprep.subr.bf16.mxu0 0
  %59 = vmatpush1.bf16.msra.mxu0 0
  %60 = vmatprep.subr.bf16.mxu0 0
  %61 = vmatpush1.bf16.msra.mxu0 0
  %62 = vmatprep.subr.bf16.mxu0 0
  %63 = vmatpush1.bf16.msra.mxu0 0
  %64 = vmatprep.subr.bf16.mxu0 0
  %65 = vmatpush1.bf16.msra.mxu0 0
  %66 = vmatprep.subr.bf16.mxu0 0
  %67 = vmatpush1.bf16.msra.mxu0 0
  %68 = vmatprep.subr.bf16.mxu0 0
  %69 = vmatpush1.bf16.msra.mxu0 0
  %70 = vmatprep.subr.bf16.mxu0 0
  %71 = vmatpush1.bf16.msra.mxu0 0
  %72 = vmatprep.subr.bf16.mxu0 0
  %73 = vmatpush1.bf16.msra.mxu0 0
  %74 = vmatprep.subr.bf16.mxu0 0
  %75 = vmatpush1.bf16.msra.mxu0 0
  %76 = vmatprep.subr.bf16.mxu0 0
  %77 = vmatpush1.bf16.msra.mxu0 0
  %78 = vmatprep.subr.bf16.mxu0 0
  %79 = vmatpush1.bf16.msra.mxu0 0
  %80 = vmatprep.mubr.bf16.mxu0 0
  %81 = vmatmul.mubr.bf16.gmra.mrb[0].mxu0 %v46
  %v82 = vpop.f32.mrb[0].mxu0
  %v83 = vadd.f32 %v26, %v82
  %v84 = vpop.f32.mrb[0].mxu0
  %v85 = vpop.f32.mrb[0].mxu0
  %v86 = vadd.f32 %v26, %v85
  %v87 = vpop.f32.mrb[0].mxu0
  %88 = vdwg.mxu0
  %v89 = vld [vmem:[%s1] sm:$0xff]
  %v90 = vld [vmem:[%s1 + $0x8] sm:$0xff]
  %v91 = vmul.f32 %v83, %v89
  %v92 = vmul.f32 %v86, %v90
  %vm93 = vcmask 7168
  %94 = vst.msk [vmem:[%s4] sm:$0xff] %vm93, %v91
  %95 = vst.msk [vmem:[%s4 + $0x8] sm:$0xff] %vm93, %v92
  // Predicated region
  $region18: #{tpu_custom_call.1} parent=0 // pred_check
    _
  $region19: #{tpu_custom_call.1} parent=0 // pred_check_branch
    %97 = sbr.rel (0) target = $region21
  $region20: #{tpu_custom_call.1} parent=0 // pred_region
    _
  $region21: #{tpu_custom_call.1} parent=0 // pred_fallthru
    _
  // Predicated region
  $region22: #{tpu_custom_call.1} parent=0 // pred_check
    _
  $region23: #{tpu_custom_call.1} parent=0 // pred_check_branch
    %99 = sbr.rel (0) target = $region25
  $region24: #{tpu_custom_call.1} parent=0 // pred_region
    _
  $region25: #{tpu_custom_call.1} parent=0 // pred_fallthru
    _

</llo_original>
